<compile_context>
chip_gen: v5e
topology: v5e:2x2
jax: 0.10.0
libtpu: 0.0.40
codegen_flags: <defaults>
</compile_context>

<pallas_src>
import numpy as np
import jax
import jax.numpy as jnp
from jax.experimental import pallas as pl
from jax.experimental.pallas import tpu as pltpu


# ---------------------------------------------------------------------------
# Fused kernel: Conv3x3+BN+ReLU -> Conv3x3+BN+ReLU for one batch element.
# ---------------------------------------------------------------------------
def fused_conv_block(x2d, w1b, b1l, w2b, b2l, *, H, W, Cin, Cout):
    """x2d: (N, H, W*Cin) channels-last-flattened input. Returns (N, H, W*Cout)."""
    N = x2d.shape[0]
    WCi, WCo = W * Cin, W * Cout

    def kernel(x_ref, w1_ref, b1_ref, w2_ref, b2_ref, o_ref, xpad, midpad):
        # x_ref : (1, H, WCi)      w1_ref: (3, WCi, WCo)   b1_ref: (1, WCo)
        # w2_ref: (3, WCo, WCo)    b2_ref: (1, WCo)        o_ref : (1, H, WCo)
        # xpad  : VMEM (H+2, WCi)  midpad: VMEM (H+2, WCo)
        zrow_i = jnp.zeros((1, WCi), jnp.float32)
        zrow_o = jnp.zeros((1, WCo), jnp.float32)

        # ---- stage 1: vertical halo in VMEM; horizontal pad is baked into w1b
        xpad[pl.ds(0, 1), :] = zrow_i
        xpad[pl.ds(H + 1, 1), :] = zrow_i
        xpad[pl.ds(1, H), :] = x_ref[0].astype(jnp.float32)

        acc = jnp.zeros((H, WCo), jnp.float32)
        for kh in range(3):                       # 3 lane-dense MXU matmuls
            acc += jnp.dot(xpad[pl.ds(kh, H), :], w1_ref[kh],
                           preferred_element_type=jnp.float32)
        y1 = jnp.maximum(acc + b1_ref[...], 0.0)  # folded BN bias + ReLU

        # ---- stage 2: stage-1 activation stays in VMEM (no HBM round-trip)
        midpad[pl.ds(0, 1), :] = zrow_o
        midpad[pl.ds(H + 1, 1), :] = zrow_o
        midpad[pl.ds(1, H), :] = y1

        acc2 = jnp.zeros((H, WCo), jnp.float32)
        for kh in range(3):
            acc2 += jnp.dot(midpad[pl.ds(kh, H), :], w2_ref[kh],
                            preferred_element_type=jnp.float32)
        y2 = jnp.maximum(acc2 + b2_ref[...], 0.0)

        o_ref[0] = y2.astype(o_ref.dtype)         # (H, 128): unmasked lane-dense store

    return pl.pallas_call(
        kernel,
        out_shape=jax.ShapeDtypeStruct((N, H, WCo), x2d.dtype),
        grid=(N,),
        in_specs=[
            pl.BlockSpec((1, H, WCi), lambda n: (n, 0, 0)),
            pl.BlockSpec((3, WCi, WCo), lambda n: (0, 0, 0)),
            pl.BlockSpec((1, WCo), lambda n: (0, 0)),
            pl.BlockSpec((3, WCo, WCo), lambda n: (0, 0, 0)),
            pl.BlockSpec((1, WCo), lambda n: (0, 0)),
        ],
        out_specs=pl.BlockSpec((1, H, WCo), lambda n: (n, 0, 0)),
        scratch_shapes=[
            pltpu.VMEM((H + 2, WCi), jnp.float32),   # vertically padded input
            pltpu.VMEM((H + 2, WCo), jnp.float32),   # vertically padded stage-1 act
        ],
        compiler_params=pltpu.CompilerParams(
            dimension_semantics=("parallel",)),      # batch across cores (v7x)
    )(x2d, w1b, b1l, w2b, b2l)


# ---------------------------------------------------------------------------
# Host-side weight preparation (one-time, outside the kernel).
# ---------------------------------------------------------------------------
def make_banded(w, W):
    """w: (3, 3, Cin, Cout) conv weights (BN scale already folded in).

    Returns (3, W*Cin, W*Cout) matrices M[kh] such that for the vertically
    padded, lane-flattened input xv (H+2, W*Cin):
        out[h, wo*Cout+co] = sum_kh (xv[h+kh, :] @ M[kh])[wo*Cout+co]
    i.e. the kw shift and the left/right zero padding are encoded in M.
    """
    w_np = np.asarray(jax.device_get(w)).astype(np.float32)
    _, _, Cin, Cout = w_np.shape
    M = np.zeros((3, W * Cin, W * Cout), np.float32)
    for kh in range(3):
        for kw in range(3):
            for wo in range(W):
                src = wo + kw - 1            # input column; <0 / >=W is zero pad
                if 0 <= src < W:
                    M[kh, src * Cin:(src + 1) * Cin,
                      wo * Cout:(wo + 1) * Cout] = w_np[kh, kw]
    return jnp.asarray(M)


def fold_bn(conv_bias, gamma, beta, running_mean, running_var, eps=1e-5):
    """Fold eval-mode BatchNorm (+ conv bias) into per-channel scale/bias."""
    scale = gamma / jnp.sqrt(running_var + eps)
    bias = (conv_bias - running_mean) * scale + beta
    return scale, bias


def prepare_kernel_params(params, W):
    """Fold BN scale into the weights and build lane-dense banded operands."""
    Cout = params["w1"].shape[-1]
    w1f = params["w1"] * params["scale1"]          # per-output-channel scale
    w2f = params["w2"] * params["scale2"]
    return {
        "w1b": make_banded(w1f, W),                            # (3, W*Cin,  W*Cout)
        "w2b": make_banded(w2f, W),                            # (3, W*Cout, W*Cout)
        "b1l": jnp.tile(params["bias1"], W).reshape(1, W * Cout).astype(jnp.float32),
        "b2l": jnp.tile(params["bias2"], W).reshape(1, W * Cout).astype(jnp.float32),
    }


def init_params(key, in_ch, out_ch):
    ks = jax.random.split(key, 12)
    p = {}
    # Conv weights stored as (kh, kw, Cin, Cout); PyTorch's (Cout, Cin, 3, 3)
    # would just be a transpose of this.
    p["w1"] = jax.random.normal(ks[0], (3, 3, in_ch, out_ch), jnp.float32) * 0.1
    b1 = jax.random.normal(ks[1], (out_ch,), jnp.float32) * 0.1
    p["w2"] = jax.random.normal(ks[2], (3, 3, out_ch, out_ch), jnp.float32) * 0.1
    b2 = jax.random.normal(ks[3], (out_ch,), jnp.float32) * 0.1
    # BatchNorm2d parameters + running stats (deterministic, non-trivial).
    g1 = 1.0 + 0.1 * jax.random.normal(ks[4], (out_ch,), jnp.float32)
    be1 = 0.1 * jax.random.normal(ks[5], (out_ch,), jnp.float32)
    m1 = 0.1 * jax.random.normal(ks[6], (out_ch,), jnp.float32)
    v1 = 1.0 + 0.1 * jax.random.uniform(ks[7], (out_ch,), jnp.float32)
    g2 = 1.0 + 0.1 * jax.random.normal(ks[8], (out_ch,), jnp.float32)
    be2 = 0.1 * jax.random.normal(ks[9], (out_ch,), jnp.float32)
    m2 = 0.1 * jax.random.normal(ks[10], (out_ch,), jnp.float32)
    v2 = 1.0 + 0.1 * jax.random.uniform(ks[11], (out_ch,), jnp.float32)
    p["scale1"], p["bias1"] = fold_bn(b1, g1, be1, m1, v1)
    p["scale2"], p["bias2"] = fold_bn(b2, g2, be2, m2, v2)
    return p


def conv_block_forward(x_nchw, params, kparams):
    """Equivalent of Conv(in_ch, out_ch).forward(x) with x in NCHW (eval-mode BN)."""
    N, Cin, H, W = x_nchw.shape
    Cout = params["w1"].shape[-1]
    # NCHW -> NHWC -> (N, H, W*Cin): channels flattened into the lane axis.
    x2d = jnp.transpose(x_nchw, (0, 2, 3, 1)).reshape(N, H, W * Cin)
    out2d = fused_conv_block(x2d, kparams["w1b"], kparams["b1l"],
                             kparams["w2b"], kparams["b2l"],
                             H=H, W=W, Cin=Cin, Cout=Cout)
    return jnp.transpose(out2d.reshape(N, H, W, Cout), (0, 3, 1, 2))


def _reference_forward(x_nchw, params):
    """Plain-JAX reference (NCHW conv) for correctness checking."""
    def stage(x, w, scale, bias):
        w_oihw = jnp.transpose(w, (3, 2, 0, 1))   # (3,3,Cin,Cout) -> OIHW
        y = jax.lax.conv_general_dilated(
            x, w_oihw, window_strides=(1, 1), padding="SAME",
            dimension_numbers=("NCHW", "OIHW", "NCHW"))
        y = y * scale[None, :, None, None] + bias[None, :, None, None]
        return jnp.maximum(y, 0.0)
    x = stage(x_nchw, params["w1"], params["scale1"], params["bias1"])
    x = stage(x, params["w2"], params["scale2"], params["bias2"])
    return x


if __name__ == "__main__":
    key = jax.random.PRNGKey(0)
    k_x, k_p = jax.random.split(key)

    in_ch, out_ch = 4, 8
    H = W = 16
    x = jax.random.normal(k_x, (2, in_ch, H, W), jnp.float32)   # NCHW
    params = init_params(k_p, in_ch, out_ch)
    kparams = prepare_kernel_params(params, W)                  # one-time host prep

    out = jax.block_until_ready(conv_block_forward(x, params, kparams))
    ref = jax.block_until_ready(_reference_forward(x, params))

    assert out.shape == (2, out_ch, H, W)
    assert jnp.allclose(out, ref, atol=1e-4, rtol=1e-4), "mismatch vs reference"

    print("KERNEL_OK")
</pallas_src>

<mosaic_0001>
module attributes {stable_mosaic.version = 11 : i64} {
  func.func @kernel(%arg0: i32, %arg1: memref<1x16x64xf32, #tpu.memory_space<vmem>>, %arg2: memref<3x64x128xf32, #tpu.memory_space<vmem>>, %arg3: memref<1x128xf32, #tpu.memory_space<vmem>>, %arg4: memref<3x128x128xf32, #tpu.memory_space<vmem>>, %arg5: memref<1x128xf32, #tpu.memory_space<vmem>>, %arg6: memref<1x16x128xf32, #tpu.memory_space<vmem>>, %arg7: memref<18x64xf32, #tpu.memory_space<vmem>>, %arg8: memref<18x128xf32, #tpu.memory_space<vmem>>) attributes {dimension_semantics = [#tpu.dimension_semantics<parallel>], iteration_bounds = array<i64: 2>, scalar_prefetch = 0 : i64, scratch_operands = 2 : i64, tpu.core_type = #tpu.core_type<tc>, window_params = [{transform_indices = @transform_0, window_bounds = array<i64: 1, 16, 64>}, {pipeline_mode = #tpu.pipeline_mode<synchronous>, transform_indices = @transform_1, window_bounds = array<i64: 3, 64, 128>}, {pipeline_mode = #tpu.pipeline_mode<synchronous>, transform_indices = @transform_2, window_bounds = array<i64: 1, 128>}, {pipeline_mode = #tpu.pipeline_mode<synchronous>, transform_indices = @transform_3, window_bounds = array<i64: 3, 128, 128>}, {pipeline_mode = #tpu.pipeline_mode<synchronous>, transform_indices = @transform_4, window_bounds = array<i64: 1, 128>}, {transform_indices = @transform_5, window_bounds = array<i64: 1, 16, 128>}]} {
    %cst = arith.constant 0.000000e+00 : f32
    %0 = vector.broadcast %cst : f32 to vector<1x64xf32>
    %cst_0 = arith.constant 0.000000e+00 : f32
    %1 = vector.broadcast %cst_0 : f32 to vector<1x128xf32>
    %c0 = arith.constant 0 : index
    %c0_1 = arith.constant 0 : index
    %2 = vector.load %arg7[%c0, %c0_1] : memref<18x64xf32, #tpu.memory_space<vmem>>, vector<1x64xf32>
    tpu.vector_store %arg7[%c0, %c0_1], %0 {strides = array<i32>} : memref<18x64xf32, #tpu.memory_space<vmem>>, vector<1x64xf32>,
    %c17 = arith.constant 17 : index
    %c0_2 = arith.constant 0 : index
    %3 = vector.load %arg7[%c17, %c0_2] : memref<18x64xf32, #tpu.memory_space<vmem>>, vector<1x64xf32>
    tpu.vector_store %arg7[%c17, %c0_2], %0 {strides = array<i32>} : memref<18x64xf32, #tpu.memory_space<vmem>>, vector<1x64xf32>,
    %c0_3 = arith.constant 0 : index
    %c0_4 = arith.constant 0 : index
    %c0_5 = arith.constant 0 : index
    %4 = vector.load %arg1[%c0_3, %c0_4, %c0_5] : memref<1x16x64xf32, #tpu.memory_space<vmem>>, vector<1x16x64xf32>
    %5 = vector.shape_cast %4 : vector<1x16x64xf32> to vector<16x64xf32>
    %c1 = arith.constant 1 : index
    %c0_6 = arith.constant 0 : index
    %6 = vector.load %arg7[%c1, %c0_6] : memref<18x64xf32, #tpu.memory_space<vmem>>, vector<16x64xf32>
    tpu.vector_store %arg7[%c1, %c0_6], %5 {strides = array<i32>} : memref<18x64xf32, #tpu.memory_space<vmem>>, vector<16x64xf32>,
    %cst_7 = arith.constant 0.000000e+00 : f32
    %7 = vector.broadcast %cst_7 : f32 to vector<16x128xf32>
    %c0_8 = arith.constant 0 : index
    %c0_9 = arith.constant 0 : index
    %8 = vector.load %arg7[%c0_8, %c0_9] : memref<18x64xf32, #tpu.memory_space<vmem>>, vector<16x64xf32>
    %c0_10 = arith.constant 0 : index
    %c0_11 = arith.constant 0 : index
    %c0_12 = arith.constant 0 : index
    %9 = vector.load %arg2[%c0_10, %c0_11, %c0_12] : memref<3x64x128xf32, #tpu.memory_space<vmem>>, vector<1x64x128xf32>
    %10 = vector.shape_cast %9 : vector<1x64x128xf32> to vector<64x128xf32>
    %cst_13 = arith.constant dense<0.000000e+00> : vector<16x128xf32>
    %11 = tpu.matmul %8, %10, %cst_13 {dimension_numbers = #tpu.dot_dimension_numbers<[1], [0], [0], [1], [0, 0, 1, 1], [], []>} : vector<16x64xf32>, vector<64x128xf32>, vector<16x128xf32> -> vector<16x128xf32>
    %12 = arith.addf %7, %11 : vector<16x128xf32>
    %c1_14 = arith.constant 1 : index
    %c0_15 = arith.constant 0 : index
    %13 = vector.load %arg7[%c1_14, %c0_15] : memref<18x64xf32, #tpu.memory_space<vmem>>, vector<16x64xf32>
    %c1_16 = arith.constant 1 : index
    %c0_17 = arith.constant 0 : index
    %c0_18 = arith.constant 0 : index
    %14 = vector.load %arg2[%c1_16, %c0_17, %c0_18] : memref<3x64x128xf32, #tpu.memory_space<vmem>>, vector<1x64x128xf32>
    %15 = vector.shape_cast %14 : vector<1x64x128xf32> to vector<64x128xf32>
    %cst_19 = arith.constant dense<0.000000e+00> : vector<16x128xf32>
    %16 = tpu.matmul %13, %15, %cst_19 {dimension_numbers = #tpu.dot_dimension_numbers<[1], [0], [0], [1], [0, 0, 1, 1], [], []>} : vector<16x64xf32>, vector<64x128xf32>, vector<16x128xf32> -> vector<16x128xf32>
    %17 = arith.addf %12, %16 : vector<16x128xf32>
    %c2 = arith.constant 2 : index
    %c0_20 = arith.constant 0 : index
    %18 = vector.load %arg7[%c2, %c0_20] : memref<18x64xf32, #tpu.memory_space<vmem>>, vector<16x64xf32>
    %c2_21 = arith.constant 2 : index
    %c0_22 = arith.constant 0 : index
    %c0_23 = arith.constant 0 : index
    %19 = vector.load %arg2[%c2_21, %c0_22, %c0_23] : memref<3x64x128xf32, #tpu.memory_space<vmem>>, vector<1x64x128xf32>
    %20 = vector.shape_cast %19 : vector<1x64x128xf32> to vector<64x128xf32>
    %cst_24 = arith.constant dense<0.000000e+00> : vector<16x128xf32>
    %21 = tpu.matmul %18, %20, %cst_24 {dimension_numbers = #tpu.dot_dimension_numbers<[1], [0], [0], [1], [0, 0, 1, 1], [], []>} : vector<16x64xf32>, vector<64x128xf32>, vector<16x128xf32> -> vector<16x128xf32>
    %22 = arith.addf %17, %21 : vector<16x128xf32>
    %c0_25 = arith.constant 0 : index
    %c0_26 = arith.constant 0 : index
    %23 = vector.load %arg3[%c0_25, %c0_26] : memref<1x128xf32, #tpu.memory_space<vmem>>, vector<1x128xf32>
    %24 = vector.broadcast %23 : vector<1x128xf32> to vector<16x128xf32>
    %25 = arith.addf %22, %24 : vector<16x128xf32>
    %cst_27 = arith.constant 0.000000e+00 : f32
    %26 = vector.broadcast %cst_27 : f32 to vector<16x128xf32>
    %27 = arith.maximumf %25, %26 : vector<16x128xf32>
    %c0_28 = arith.constant 0 : index
    %c0_29 = arith.constant 0 : index
    %28 = vector.load %arg8[%c0_28, %c0_29] : memref<18x128xf32, #tpu.memory_space<vmem>>, vector<1x128xf32>
    tpu.vector_store %arg8[%c0_28, %c0_29], %1 {strides = array<i32>} : memref<18x128xf32, #tpu.memory_space<vmem>>, vector<1x128xf32>,
    %c17_30 = arith.constant 17 : index
    %c0_31 = arith.constant 0 : index
    %29 = vector.load %arg8[%c17_30, %c0_31] : memref<18x128xf32, #tpu.memory_space<vmem>>, vector<1x128xf32>
    tpu.vector_store %arg8[%c17_30, %c0_31], %1 {strides = array<i32>} : memref<18x128xf32, #tpu.memory_space<vmem>>, vector<1x128xf32>,
    %c1_32 = arith.constant 1 : index
    %c0_33 = arith.constant 0 : index
    %30 = vector.load %arg8[%c1_32, %c0_33] : memref<18x128xf32, #tpu.memory_space<vmem>>, vector<16x128xf32>
    tpu.vector_store %arg8[%c1_32, %c0_33], %27 {strides = array<i32>} : memref<18x128xf32, #tpu.memory_space<vmem>>, vector<16x128xf32>,
    %cst_34 = arith.constant 0.000000e+00 : f32
    %31 = vector.broadcast %cst_34 : f32 to vector<16x128xf32>
    %c0_35 = arith.constant 0 : index
    %c0_36 = arith.constant 0 : index
    %32 = vector.load %arg8[%c0_35, %c0_36] : memref<18x128xf32, #tpu.memory_space<vmem>>, vector<16x128xf32>
    %c0_37 = arith.constant 0 : index
    %c0_38 = arith.constant 0 : index
    %c0_39 = arith.constant 0 : index
    %33 = vector.load %arg4[%c0_37, %c0_38, %c0_39] : memref<3x128x128xf32, #tpu.memory_space<vmem>>, vector<1x128x128xf32>
    %34 = vector.shape_cast %33 : vector<1x128x128xf32> to vector<128x128xf32>
    %cst_40 = arith.constant dense<0.000000e+00> : vector<16x128xf32>
    %35 = tpu.matmul %32, %34, %cst_40 {dimension_numbers = #tpu.dot_dimension_numbers<[1], [0], [0], [1], [0, 0, 1, 1], [], []>} : vector<16x128xf32>, vector<128x128xf32>, vector<16x128xf32> -> vector<16x128xf32>
    %36 = arith.addf %31, %35 : vector<16x128xf32>
    %c1_41 = arith.constant 1 : index
    %c0_42 = arith.constant 0 : index
    %37 = vector.load %arg8[%c1_41, %c0_42] : memref<18x128xf32, #tpu.memory_space<vmem>>, vector<16x128xf32>
    %c1_43 = arith.constant 1 : index
    %c0_44 = arith.constant 0 : index
    %c0_45 = arith.constant 0 : index
    %38 = vector.load %arg4[%c1_43, %c0_44, %c0_45] : memref<3x128x128xf32, #tpu.memory_space<vmem>>, vector<1x128x128xf32>
    %39 = vector.shape_cast %38 : vector<1x128x128xf32> to vector<128x128xf32>
    %cst_46 = arith.constant dense<0.000000e+00> : vector<16x128xf32>
    %40 = tpu.matmul %37, %39, %cst_46 {dimension_numbers = #tpu.dot_dimension_numbers<[1], [0], [0], [1], [0, 0, 1, 1], [], []>} : vector<16x128xf32>, vector<128x128xf32>, vector<16x128xf32> -> vector<16x128xf32>
    %41 = arith.addf %36, %40 : vector<16x128xf32>
    %c2_47 = arith.constant 2 : index
    %c0_48 = arith.constant 0 : index
    %42 = vector.load %arg8[%c2_47, %c0_48] : memref<18x128xf32, #tpu.memory_space<vmem>>, vector<16x128xf32>
    %c2_49 = arith.constant 2 : index
    %c0_50 = arith.constant 0 : index
    %c0_51 = arith.constant 0 : index
    %43 = vector.load %arg4[%c2_49, %c0_50, %c0_51] : memref<3x128x128xf32, #tpu.memory_space<vmem>>, vector<1x128x128xf32>
    %44 = vector.shape_cast %43 : vector<1x128x128xf32> to vector<128x128xf32>
    %cst_52 = arith.constant dense<0.000000e+00> : vector<16x128xf32>
    %45 = tpu.matmul %42, %44, %cst_52 {dimension_numbers = #tpu.dot_dimension_numbers<[1], [0], [0], [1], [0, 0, 1, 1], [], []>} : vector<16x128xf32>, vector<128x128xf32>, vector<16x128xf32> -> vector<16x128xf32>
    %46 = arith.addf %41, %45 : vector<16x128xf32>
    %c0_53 = arith.constant 0 : index
    %c0_54 = arith.constant 0 : index
    %47 = vector.load %arg5[%c0_53, %c0_54] : memref<1x128xf32, #tpu.memory_space<vmem>>, vector<1x128xf32>
    %48 = vector.broadcast %47 : vector<1x128xf32> to vector<16x128xf32>
    %49 = arith.addf %46, %48 : vector<16x128xf32>
    %cst_55 = arith.constant 0.000000e+00 : f32
    %50 = vector.broadcast %cst_55 : f32 to vector<16x128xf32>
    %51 = arith.maximumf %49, %50 : vector<16x128xf32>
    %c0_56 = arith.constant 0 : index
    %c0_57 = arith.constant 0 : index
    %c0_58 = arith.constant 0 : index
    %52 = vector.load %arg6[%c0_56, %c0_57, %c0_58] : memref<1x16x128xf32, #tpu.memory_space<vmem>>, vector<1x16x128xf32>
    %53 = vector.shape_cast %52 : vector<1x16x128xf32> to vector<16x128xf32>
    %54 = vector.shape_cast %51 : vector<16x128xf32> to vector<1x16x128xf32>
    tpu.vector_store %arg6[%c0_56, %c0_57, %c0_58], %54 {strides = array<i32>} : memref<1x16x128xf32, #tpu.memory_space<vmem>>, vector<1x16x128xf32>,
    return
  }
  func.func @transform_0(%arg0: i32) -> (i32, i32, i32) {
    %c0_i32 = arith.constant 0 : i32
    %c0_i32_0 = arith.constant 0 : i32
    %c0_i32_1 = arith.constant 0 : i32
    return %arg0, %c0_i32, %c0_i32_0 : i32, i32, i32
  }
  func.func @transform_1(%arg0: i32) -> (i32, i32, i32) {
    %c0_i32 = arith.constant 0 : i32
    %c0_i32_0 = arith.constant 0 : i32
    %c0_i32_1 = arith.constant 0 : i32
    %c0_i32_2 = arith.constant 0 : i32
    return %c0_i32, %c0_i32_0, %c0_i32_1 : i32, i32, i32
  }
  func.func @transform_2(%arg0: i32) -> (i32, i32) {
    %c0_i32 = arith.constant 0 : i32
    %c0_i32_0 = arith.constant 0 : i32
    %c0_i32_1 = arith.constant 0 : i32
    return %c0_i32, %c0_i32_0 : i32, i32
  }
  func.func @transform_3(%arg0: i32) -> (i32, i32, i32) {
    %c0_i32 = arith.constant 0 : i32
    %c0_i32_0 = arith.constant 0 : i32
    %c0_i32_1 = arith.constant 0 : i32
    %c0_i32_2 = arith.constant 0 : i32
    return %c0_i32, %c0_i32_0, %c0_i32_1 : i32, i32, i32
  }
  func.func @transform_4(%arg0: i32) -> (i32, i32) {
    %c0_i32 = arith.constant 0 : i32
    %c0_i32_0 = arith.constant 0 : i32
    %c0_i32_1 = arith.constant 0 : i32
    return %c0_i32, %c0_i32_0 : i32, i32
  }
  func.func @transform_5(%arg0: i32) -> (i32, i32, i32) {
    %c0_i32 = arith.constant 0 : i32
    %c0_i32_0 = arith.constant 0 : i32
    %c0_i32_1 = arith.constant 0 : i32
    return %arg0, %c0_i32, %c0_i32_0 : i32, i32, i32
  }
}

</mosaic_0001>

<llo_original>
// kernel: tpu_custom_call.1
$region0: #{tpu_custom_call.1}
  #allocation0 [shape = 'u32[]', space=smem, size = 0x4, offset = 0x4, fixed_abs, tag = 'smem constant byte address 0x4 - core index']
  #allocation1 [shape = 'u32[72,128]{1,0:T(1,128)}', space=vmem, size = 0x9000, scoped, tag = 'internal scratch']
  #allocation2 [shape = 'f32[18,64]{1,0:T(8,128)}', space=vmem, size = 0x3000, scoped, tag = 'scratch operand']
  #allocation3 [shape = 'f32[18,128]{1,0:T(8,128)}', space=vmem, size = 0x3000, scoped, tag = 'scratch operand']
  %s0 = inlined_call_operand.hbm [shape: f32[2,16,64], index: 0, kind: input, shape index: {}]
  %s1 = inlined_call_operand.hbm [shape: f32[3,64,128], index: 1, kind: input, shape index: {}]
  %s2 = inlined_call_operand.vmem [shape: f32[1,128], index: 2, kind: input, shape index: {}]
  %s3 = inlined_call_operand.hbm [shape: f32[3,128,128], index: 3, kind: input, shape index: {}]
  %s4 = inlined_call_operand.vmem [shape: f32[1,128], index: 4, kind: input, shape index: {}]
  %s5 = inlined_call_operand.hbm [shape: f32[2,16,128], index: 5, kind: output, shape index: {}]
  %s6 = sld [smem:[#allocation0]]
  $region65: #{tpu_custom_call.1} parent=0
    _
  %s8 = ssub.s32 1, %s6
  %s9 = scalar_select 0, %s8, %s6
  $region1: #{tpu_custom_call.1} parent=0
    #allocation4 [shape = 'u8[16384]{0}', space=vmem, size = 0x4000, scoped, tag = 'input window, operand 0']
    #allocation5 [shape = 's32[2]{0}', space=sflag, size = 0x8, scoped, tag = 'scoped memory for tpu_custom_call.1']
    #allocation6 [shape = 's32[2]{0}', space=sflag, size = 0x8, scoped, tag = 'scoped memory for tpu_custom_call.1']
    #allocation7 [shape = 'u8[98304]{0}', space=vmem, size = 0x18000, scoped, tag = 'input window, operand 1, single buffered']
    #allocation8 [shape = 's32[1]{0}', space=sflag, size = 0x4, scoped, tag = 'scoped memory for tpu_custom_call.1']
    #allocation9 [shape = 'u8[196608]{0}', space=vmem, size = 0x30000, scoped, tag = 'input window, operand 3, single buffered']
    #allocation10 [shape = 'u8[16384]{0}', space=vmem, size = 0x4000, scoped, tag = 'output window, operand 0']
    %10 = vsyncpa [#allocation5], 0
    %s11 = scalar_lea.sflag [#allocation5], 1
    %12 = vsyncpa %s11, 0
    %13 = vsyncpa [#allocation8], 0
    %14 = vsyncpa [#allocation6], 0
    %s15 = scalar_lea.sflag [#allocation6], 1
    %16 = vsyncpa %s15, 0
    loop: start=0, step=1, limit=4
    $region2: #{tpu_custom_call.1} parent=1 // loop_pre_header
      _
    $region3: #{tpu_custom_call.1} parent=1 // loop_header
      %s18 = sphi 0, %s22
      %p19 = scmp.ge.s32.totalorder %s18, 4
      %s28 = sphi 0, %s30
      %s31 = sphi 0, %s28
      %s32 = sphi 0, %s31
      %s48 = sphi 0, %s32
      %s52 = sphi 0, %s52
      %s54 = sphi 0, %s52
      %s55 = sphi 0, %s54
      %s69 = sphi 0, %s55
      %s73 = sphi 0, %s73
      %s75 = sphi 0, %s73
      %s76 = sphi 0, %s75
      %s90 = sphi 0, %s76
      %s94 = sphi 0, %s94
      %s96 = sphi 0, %s94
      %s97 = sphi 0, %s96
      %s111 = sphi 0, %s97
      %s115 = sphi 0, %s115
      %s117 = sphi 0, %s115
      %s118 = sphi 0, %s117
      %s132 = sphi 0, %s118
      %s138 = sphi 0, %s140
      %s141 = sphi 0, %s138
      %s142 = sphi 0, %s141
      %s158 = sphi 0, %s142
    $region4: #{tpu_custom_call.1} parent=1 // loop_header_branch
      %21 = sbr.rel (%p19) target = $region8
    $region5: #{tpu_custom_call.1} parent=1 // loop_body
      %s23 = ssub.s32 %s18, 1
      %s24 = ssub.s32 %s18, 2
      %s25 = sadd.s32 %s18, 1
      %s26 = ssub.s32 %s18, %s25
      %p27 = scmp.eq.s32.totalorder %s26, 0
      %s29 = sadd.s32 %s28, 1
      %s30 = scalar_select %p27, %s28, %s29
      %p33 = pneg %p27
      %p34 = scmp.eq.s32.totalorder %s18, 1
      %p35 = por %p33, %p34
      %p36 = scmp.ne.s32.totalorder %s28, %s31
      %p37 = scmp.eq.s32.totalorder %s18, 0
      %p38 = por %p36, %p37
      %p39 = scmp.ne.s32.totalorder %s28, %s31
      %p40 = scmp.eq.s32.totalorder %s23, 1
      %p41 = por %p39, %p40
      %p42 = scmp.ne.s32.totalorder %s31, %s32
      %p43 = scmp.eq.s32.totalorder %s23, 0
      %p44 = por %p42, %p43
      %p45 = scmp.ne.s32.totalorder %s31, %s32
      %p46 = scmp.eq.s32.totalorder %s24, 1
      %p47 = por %p45, %p46
      %p49 = scmp.ne.s32.totalorder %s32, %s48
      %p50 = scmp.eq.s32.totalorder %s24, 0
      %p51 = por %p49, %p50
      %s53 = sadd.s32 %s52, 1
      %p56 = scmp.eq.s32.totalorder %s18, 1
      %p57 = scmp.ne.s32.totalorder %s52, %s54
      %p58 = scmp.eq.s32.totalorder %s18, 0
      %p59 = por %p57, %p58
      %p60 = scmp.ne.s32.totalorder %s52, %s54
      %p61 = scmp.eq.s32.totalorder %s23, 1
      %p62 = por %p60, %p61
      %p63 = scmp.ne.s32.totalorder %s54, %s55
      %p64 = scmp.eq.s32.totalorder %s23, 0
      %p65 = por %p63, %p64
      %p66 = scmp.ne.s32.totalorder %s54, %s55
      %p67 = scmp.eq.s32.totalorder %s24, 1
      %p68 = por %p66, %p67
      %p70 = scmp.ne.s32.totalorder %s55, %s69
      %p71 = scmp.eq.s32.totalorder %s24, 0
      %p72 = por %p70, %p71
      %s74 = sadd.s32 %s73, 1
      %p77 = scmp.eq.s32.totalorder %s18, 1
      %p78 = scmp.ne.s32.totalorder %s73, %s75
      %p79 = scmp.eq.s32.totalorder %s18, 0
      %p80 = por %p78, %p79
      %p81 = scmp.ne.s32.totalorder %s73, %s75
      %p82 = scmp.eq.s32.totalorder %s23, 1
      %p83 = por %p81, %p82
      %p84 = scmp.ne.s32.totalorder %s75, %s76
      %p85 = scmp.eq.s32.totalorder %s23, 0
      %p86 = por %p84, %p85
      %p87 = scmp.ne.s32.totalorder %s75, %s76
      %p88 = scmp.eq.s32.totalorder %s24, 1
      %p89 = por %p87, %p88
      %p91 = scmp.ne.s32.totalorder %s76, %s90
      %p92 = scmp.eq.s32.totalorder %s24, 0
      %p93 = por %p91, %p92
      %s95 = sadd.s32 %s94, 1
      %p98 = scmp.eq.s32.totalorder %s18, 1
      %p99 = scmp.ne.s32.totalorder %s94, %s96
      %p100 = scmp.eq.s32.totalorder %s18, 0
      %p101 = por %p99, %p100
      %p102 = scmp.ne.s32.totalorder %s94, %s96
      %p103 = scmp.eq.s32.totalorder %s23, 1
      %p104 = por %p102, %p103
      %p105 = scmp.ne.s32.totalorder %s96, %s97
      %p106 = scmp.eq.s32.totalorder %s23, 0
      %p107 = por %p105, %p106
      %p108 = scmp.ne.s32.totalorder %s96, %s97
      %p109 = scmp.eq.s32.totalorder %s24, 1
      %p110 = por %p108, %p109
      %p112 = scmp.ne.s32.totalorder %s97, %s111
      %p113 = scmp.eq.s32.totalorder %s24, 0
      %p114 = por %p112, %p113
      %s116 = sadd.s32 %s115, 1
      %p119 = scmp.eq.s32.totalorder %s18, 1
      %p120 = scmp.ne.s32.totalorder %s115, %s117
      %p121 = scmp.eq.s32.totalorder %s18, 0
      %p122 = por %p120, %p121
      %p123 = scmp.ne.s32.totalorder %s115, %s117
      %p124 = scmp.eq.s32.totalorder %s23, 1
      %p125 = por %p123, %p124
      %p126 = scmp.ne.s32.totalorder %s117, %s118
      %p127 = scmp.eq.s32.totalorder %s23, 0
      %p128 = por %p126, %p127
      %p129 = scmp.ne.s32.totalorder %s117, %s118
      %p130 = scmp.eq.s32.totalorder %s24, 1
      %p131 = por %p129, %p130
      %p133 = scmp.ne.s32.totalorder %s118, %s132
      %p134 = scmp.eq.s32.totalorder %s24, 0
      %p135 = por %p133, %p134
      %s136 = ssub.s32 %s18, %s25
      %p137 = scmp.eq.s32.totalorder %s136, 0
      %s139 = sadd.s32 %s138, 1
      %s140 = scalar_select %p137, %s138, %s139
      %p143 = pneg %p137
      %p144 = scmp.eq.s32.totalorder %s18, 1
      %p145 = por %p143, %p144
      %p146 = scmp.ne.s32.totalorder %s138, %s141
      %p147 = scmp.eq.s32.totalorder %s18, 0
      %p148 = por %p146, %p147
      %p149 = scmp.ne.s32.totalorder %s138, %s141
      %p150 = scmp.eq.s32.totalorder %s23, 1
      %p151 = por %p149, %p150
      %p152 = scmp.ne.s32.totalorder %s141, %s142
      %p153 = scmp.eq.s32.totalorder %s23, 0
      %p154 = por %p152, %p153
      %p155 = scmp.ne.s32.totalorder %s141, %s142
      %p156 = scmp.eq.s32.totalorder %s24, 1
      %p157 = por %p155, %p156
      %p159 = scmp.ne.s32.totalorder %s142, %s158
      %p160 = scmp.eq.s32.totalorder %s24, 0
      %p161 = por %p159, %p160
      %p162 = scmp.le.s32.totalorder 1, %s18
      %p163 = scmp.lt.s32.totalorder %s18, 3
      %p164 = pnand %p162, %p163
      %p165 = pneg %p164
      // Predicated region
      $region9: #{tpu_custom_call.1} parent=5 // pred_check
        _
      $region10: #{tpu_custom_call.1} parent=5 // pred_check_branch
        %167 = sbr.rel (%p164) target = $region12
      $region11: #{tpu_custom_call.1} parent=5 // pred_region
        %s168 = ssub.s32 %s18, 1
        // Predicated region
        $region13: #{tpu_custom_call.1} parent=11 // pred_check
          %p169 = pneg %p65
        $region14: #{tpu_custom_call.1} parent=11 // pred_check_branch
          %171 = sbr.rel (%p169) target = $region16
        $region15: #{tpu_custom_call.1} parent=11 // pred_region
          %173 = vsyncadd [#allocation8], 0
          %s174 = sshll.u32 %s1, 4
          %s175 = int_to_ptr.hbm [resolvable:$true] %s174
          %s176 = sshll.u32 [#allocation7], 4
          %s177 = int_to_ptr.vmem [resolvable:$true] %s176
          %182 = dma.hbm_to_vmem [thread:$0]  %s175, 3072, %s177, [#allocation8], 128, 128, 8
        $region16: #{tpu_custom_call.1} parent=11 // pred_fallthru
          _
        // Predicated region
        $region17: #{tpu_custom_call.1} parent=11 // pred_check
          %p183 = pneg %p86
        $region18: #{tpu_custom_call.1} parent=11 // pred_check_branch
          %185 = sbr.rel (%p183) target = $region20
        $region19: #{tpu_custom_call.1} parent=11 // pred_region
          _
        $region20: #{tpu_custom_call.1} parent=11 // pred_fallthru
          _
        // Predicated region
        $region21: #{tpu_custom_call.1} parent=11 // pred_check
          %p186 = pneg %p107
        $region22: #{tpu_custom_call.1} parent=11 // pred_check_branch
          %188 = sbr.rel (%p186) target = $region24
        $region23: #{tpu_custom_call.1} parent=11 // pred_region
          %190 = vsyncadd [#allocation8], 0
          %s191 = sshll.u32 %s3, 4
          %s192 = int_to_ptr.hbm [resolvable:$true] %s191
          %s193 = sshll.u32 [#allocation9], 4
          %s194 = int_to_ptr.vmem [resolvable:$true] %s193
          %199 = dma.hbm_to_vmem [thread:$0]  %s192, 6144, %s194, [#allocation8], 128, 128, 8
        $region24: #{tpu_custom_call.1} parent=11 // pred_fallthru
          _
        // Predicated region
        $region25: #{tpu_custom_call.1} parent=11 // pred_check
          %p200 = pneg %p128
        $region26: #{tpu_custom_call.1} parent=11 // pred_check_branch
          %202 = sbr.rel (%p200) target = $region28
        $region27: #{tpu_custom_call.1} parent=11 // pred_region
          _
        $region28: #{tpu_custom_call.1} parent=11 // pred_fallthru
          _
      $region12: #{tpu_custom_call.1} parent=5 // pred_fallthru
        _
      %p203 = scmp.lt.s32.totalorder %s18, 2
      // Predicated region
      $region29: #{tpu_custom_call.1} parent=5 // pred_check
        %p204 = pneg %p203
      $region30: #{tpu_custom_call.1} parent=5 // pred_check_branch
        %206 = sbr.rel (%p204) target = $region32
      $region31: #{tpu_custom_call.1} parent=5 // pred_region
        // Predicated region
        $region33: #{tpu_custom_call.1} parent=31 // pred_check
          %p207 = pneg %p38
        $region34: #{tpu_custom_call.1} parent=31 // pred_check_branch
          %209 = sbr.rel (%p207) target = $region36
        $region35: #{tpu_custom_call.1} parent=31 // pred_region
          %s210 = sand.u32 %s28, 1
          %s211 = scalar_lea.sflag [#allocation5], %s210
          %s212 = sand.u32 %s28, 1
          %s213 = smul.addr %s212, 16
          %s214 = scalar_lea.vmem [#allocation4], %s213
          %216 = vsyncadd %s211, 0
          %s217 = smul.addr %s18, 2
          %s218 = smul.addr %s217, 8
          %s219 = scalar_lea.hbm %s0, %s218
          %s220 = sshll.u32 %s219, 4
          %s221 = int_to_ptr.hbm [resolvable:$true] %s220
          %s222 = sshll.u32 %s214, 4
          %s223 = int_to_ptr.vmem [resolvable:$true] %s222
          %228 = dma.hbm_to_vmem [thread:$0]  %s221, 256, %s223, %s211, 128, 128, 8
        $region36: #{tpu_custom_call.1} parent=31 // pred_fallthru
          _
      $region32: #{tpu_custom_call.1} parent=5 // pred_fallthru
        _
      %p229 = scmp.le.s32.totalorder 1, %s18
      %p230 = scmp.lt.s32.totalorder %s18, 3
      %p231 = pnand %p229, %p230
      %p232 = pneg %p231
      // Predicated region
      $region37: #{tpu_custom_call.1} parent=5 // pred_check
        _
      $region38: #{tpu_custom_call.1} parent=5 // pred_check_branch
        %234 = sbr.rel (%p231) target = $region40
      $region39: #{tpu_custom_call.1} parent=5 // pred_region
        %s235 = ssub.s32 %s18, 1
        %s236 = sand.u32 %s31, 1
        %s237 = scalar_lea.sflag [#allocation5], %s236
        %s238 = sand.u32 %s31, 1
        %s239 = smul.addr %s238, 16
        %s240 = scalar_lea.vmem [#allocation4], %s239
        // Predicated region
        $region41: #{tpu_custom_call.1} parent=39 // pred_check
          %p241 = pneg %p44
        $region42: #{tpu_custom_call.1} parent=39 // pred_check_branch
          %243 = sbr.rel (%p241) target = $region44
        $region43: #{tpu_custom_call.1} parent=39 // pred_region
          %245 = dma.done %s237, 256
        $region44: #{tpu_custom_call.1} parent=39 // pred_fallthru
          _
        // Predicated region
        $region45: #{tpu_custom_call.1} parent=39 // pred_check
          %p246 = pneg %p65
        $region46: #{tpu_custom_call.1} parent=39 // pred_check_branch
          %248 = sbr.rel (%p246) target = $region48
        $region47: #{tpu_custom_call.1} parent=39 // pred_region
          %250 = dma.done [#allocation8], 3072
        $region48: #{tpu_custom_call.1} parent=39 // pred_fallthru
          _
        // Predicated region
        $region49: #{tpu_custom_call.1} parent=39 // pred_check
          %p251 = pneg %p107
        $region50: #{tpu_custom_call.1} parent=39 // pred_check_branch
          %253 = sbr.rel (%p251) target = $region52
        $region51: #{tpu_custom_call.1} parent=39 // pred_region
          %255 = dma.done [#allocation8], 6144
        $region52: #{tpu_custom_call.1} parent=39 // pred_fallthru
          _
        %s256 = sand.u32 %s31, 1
        %s257 = scalar_lea.sflag [#allocation5], %s256
        %s258 = sand.u32 %s31, 1
        %s259 = smul.addr %s258, 16
        %s260 = scalar_lea.vmem [#allocation4], %s259
        %p261 = pneg %p44
        %p262 = pneg %p41
        %p263 = pneg %p65
        %p264 = pneg %p62
        %p265 = pneg %p86
        %p266 = pneg %p83
        %p267 = pneg %p107
        %p268 = pneg %p104
        %p269 = pneg %p128
        %p270 = pneg %p125
        %p271 = pneg %p154
        %p272 = pneg %p151
        %s273 = sand.u32 %s141, 1
        %s274 = scalar_lea.sflag [#allocation6], %s273
        %s275 = sand.u32 %s141, 1
        %s276 = smul.addr %s275, 16
        %s277 = scalar_lea.vmem [#allocation10], %s276
        %vm278 = vcmask 516096
        %279 = vst.msk [vmem:[#allocation2] sm:$0x1] %vm278, 0.0
        %280 = vst.msk [vmem:[#allocation2 + $0x11] sm:$0x1] %vm278, 0.0
        %v281 = vld [vmem:[%s240] sm:$0xff]
        %v282 = vld [vmem:[%s240 + $0x8] sm:$0xff]
        %vm283 = vcmask 523264
        %284 = vst.msk [vmem:[#allocation2 + $0x1] sm:$0xff] %vm283, %v281
        %285 = vst.msk [vmem:[#allocation2 + $0x9] sm:$0xff] %vm283, %v282
        %v286 = vld [vmem:[#allocation2] sm:$0xff]
        %v287 = vld [vmem:[#allocation2 + $0x8] sm:$0xff]
        %v288 = vld [vmem:[#allocation7] sm:$0xff]
        %v289 = vld [vmem:[#allocation7 + $0x8] sm:$0xff]
        %v290 = vld [vmem:[#allocation7 + $0x10] sm:$0xff]
        %v291 = vld [vmem:[#allocation7 + $0x18] sm:$0xff]
        %v292 = vld [vmem:[#allocation7 + $0x20] sm:$0xff]
        %v293 = vld [vmem:[#allocation7 + $0x28] sm:$0xff]
        %v294 = vld [vmem:[#allocation7 + $0x30] sm:$0xff]
        %v295 = vld [vmem:[#allocation7 + $0x38] sm:$0xff]
        %v296 = vld [vmem:[#allocation2 + $0x1] sm:$0xff]
        %v297 = vld [vmem:[#allocation2 + $0x9] sm:$0xff]
        %s298 = scalar_lea.vmem [#allocation7], 64
        %v299 = vld [vmem:[%s298] sm:$0xff]
        %v300 = vld [vmem:[%s298 + $0x8] sm:$0xff]
        %v301 = vld [vmem:[%s298 + $0x10] sm:$0xff]
        %v302 = vld [vmem:[%s298 + $0x18] sm:$0xff]
        %v303 = vld [vmem:[%s298 + $0x20] sm:$0xff]
        %v304 = vld [vmem:[%s298 + $0x28] sm:$0xff]
        %v305 = vld [vmem:[%s298 + $0x30] sm:$0xff]
        %v306 = vld [vmem:[%s298 + $0x38] sm:$0xff]
        %v308 = vsel %vm283, %v296, 0
        %v311 = vsel %vm283, %v297, 0
        %313 = vmatpush.msra.mxu0 0.0
        %314 = vmatpush.msra.mxu0 0.0
        %315 = vmatpush.msra.mxu0 0.0
        %316 = vmatpush.msra.mxu0 0.0
        %317 = vmatpush.msra.mxu0 0.0
        %318 = vmatpush.msra.mxu0 0.0
        %319 = vmatpush.msra.mxu0 0.0
        %320 = vmatpush.msra.mxu0 0.0
        %321 = vmatpush.msra.mxu0 %v306
        %322 = vmatpush.msra.mxu0 %v305
        %323 = vmatpush.msra.mxu0 %v304
        %324 = vmatpush.msra.mxu0 %v303
        %325 = vmatpush.msra.mxu0 %v302
        %326 = vmatpush.msra.mxu0 %v301
        %327 = vmatpush.msra.mxu0 %v300
        %328 = vmatpush.msra.mxu0 %v299
        %329 = vmatmul.f32.gmra.mxu0 %v308
        %v330 = vpop.f32.mrf.mxu0
        %v331 = vadd.f32 0.0, %v330
        %332 = vmatmul.f32.gmra.mxu0 %v311
        %v333 = vpop.f32.mrf.mxu0
        %v334 = vadd.f32 0.0, %v333
        %335 = vdwg.mxu0
        %v337 = vsel %vm283, %v286, 0
        %v340 = vsel %vm283, %v287, 0
        %342 = vmatpush.msra.mxu0 0.0
        %343 = vmatpush.msra.mxu0 0.0
        %344 = vmatpush.msra.mxu0 0.0
        %345 = vmatpush.msra.mxu0 0.0
        %346 = vmatpush.msra.mxu0 0.0
        %347 = vmatpush.msra.mxu0 0.0
        %348 = vmatpush.msra.mxu0 0.0
        %349 = vmatpush.msra.mxu0 0.0
        %350 = vmatpush.msra.mxu0 %v295
        %351 = vmatpush.msra.mxu0 %v294
        %352 = vmatpush.msra.mxu0 %v293
        %353 = vmatpush.msra.mxu0 %v292
        %354 = vmatpush.msra.mxu0 %v291
        %355 = vmatpush.msra.mxu0 %v290
        %356 = vmatpush.msra.mxu0 %v289
        %357 = vmatpush.msra.mxu0 %v288
        %358 = vmatmul.f32.gmra.mxu0 %v337
        %v359 = vpop.f32.mrf.mxu0
        %v360 = vadd.f32 %v331, %v359
        %361 = vmatmul.f32.gmra.mxu0 %v340
        %v362 = vpop.f32.mrf.mxu0
        %v363 = vadd.f32 %v334, %v362
        %364 = vdwg.mxu0
        %v365 = vld [vmem:[#allocation2 + $0x2] sm:$0xff]
        %v366 = vld [vmem:[#allocation2 + $0xa] sm:$0xff]
        %s367 = scalar_lea.vmem [#allocation7], 128
        %v368 = vld [vmem:[%s367] sm:$0xff]
        %v369 = vld [vmem:[%s367 + $0x8] sm:$0xff]
        %v370 = vld [vmem:[%s367 + $0x10] sm:$0xff]
        %v371 = vld [vmem:[%s367 + $0x18] sm:$0xff]
        %v372 = vld [vmem:[%s367 + $0x20] sm:$0xff]
        %v373 = vld [vmem:[%s367 + $0x28] sm:$0xff]
        %v374 = vld [vmem:[%s367 + $0x30] sm:$0xff]
        %v375 = vld [vmem:[%s367 + $0x38] sm:$0xff]
        %v377 = vsel %vm283, %v365, 0
        %v380 = vsel %vm283, %v366, 0
        %382 = vmatpush.msra.mxu0 0.0
        %383 = vmatpush.msra.mxu0 0.0
        %384 = vmatpush.msra.mxu0 0.0
        %385 = vmatpush.msra.mxu0 0.0
        %386 = vmatpush.msra.mxu0 0.0
        %387 = vmatpush.msra.mxu0 0.0
        %388 = vmatpush.msra.mxu0 0.0
        %389 = vmatpush.msra.mxu0 0.0
        %390 = vmatpush.msra.mxu0 %v375
        %391 = vmatpush.msra.mxu0 %v374
        %392 = vmatpush.msra.mxu0 %v373
        %393 = vmatpush.msra.mxu0 %v372
        %394 = vmatpush.msra.mxu0 %v371
        %395 = vmatpush.msra.mxu0 %v370
        %396 = vmatpush.msra.mxu0 %v369
        %397 = vmatpush.msra.mxu0 %v368
        %398 = vmatmul.f32.gmra.mxu0 %v377
        %v399 = vpop.f32.mrf.mxu0
        %v400 = vadd.f32 0.0, %v399
        %401 = vmatmul.f32.gmra.mxu0 %v380
        %v402 = vpop.f32.mrf.mxu0
        %v403 = vadd.f32 0.0, %v402
        %404 = vdwg.mxu0
        %v405 = vadd.f32 %v360, %v400
        %v406 = vadd.f32 %v363, %v403
        %v407 = vld [vmem:[%s2] sm:$0x1]
        %v409 = vperm.slane %v407, 0
        %v411 = vadd.f32 %v405, %v409
        %v412 = vadd.f32 %v406, %v409
        %v413 = vmax.f32 %v411, 0.0
        %v414 = vmax.f32 %v412, 0.0
        %415 = vst [vmem:[#allocation3] sm:$0x1] 0.0
        %416 = vst [vmem:[#allocation3 + $0x11] sm:$0x1] 0.0
        %417 = vst [vmem:[#allocation3 + $0x1] sm:$0xff] %v413
        %418 = vst [vmem:[#allocation3 + $0x9] sm:$0xff] %v414
        %v419 = vld [vmem:[#allocation3] sm:$0xff]
        %v420 = vld [vmem:[#allocation3 + $0x8] sm:$0xff]
        %v421 = vld [vmem:[#allocation9] sm:$0xff]
        %v422 = vld [vmem:[#allocation9 + $0x8] sm:$0xff]
        %v423 = vld [vmem:[#allocation9 + $0x10] sm:$0xff]
        %v424 = vld [vmem:[#allocation9 + $0x18] sm:$0xff]
        %v425 = vld [vmem:[#allocation9 + $0x20] sm:$0xff]
        %v426 = vld [vmem:[#allocation9 + $0x28] sm:$0xff]
        %v427 = vld [vmem:[#allocation9 + $0x30] sm:$0xff]
        %v428 = vld [vmem:[#allocation9 + $0x38] sm:$0xff]
        %v429 = vld [vmem:[#allocation9 + $0x40] sm:$0xff]
        %v430 = vld [vmem:[#allocation9 + $0x48] sm:$0xff]
        %v431 = vld [vmem:[#allocation9 + $0x50] sm:$0xff]
        %v432 = vld [vmem:[#allocation9 + $0x58] sm:$0xff]
        %v433 = vld [vmem:[#allocation9 + $0x60] sm:$0xff]
        %v434 = vld [vmem:[#allocation9 + $0x68] sm:$0xff]
        %v435 = vld [vmem:[#allocation9 + $0x70] sm:$0xff]
        %v436 = vld [vmem:[#allocation9 + $0x78] sm:$0xff]
        %v437 = vld [vmem:[#allocation3 + $0x1] sm:$0xff]
        %v438 = vld [vmem:[#allocation3 + $0x9] sm:$0xff]
        %s439 = scalar_lea.vmem [#allocation9], 128
        %v440 = vld [vmem:[%s439] sm:$0xff]
        %v441 = vld [vmem:[%s439 + $0x8] sm:$0xff]
        %v442 = vld [vmem:[%s439 + $0x10] sm:$0xff]
        %v443 = vld [vmem:[%s439 + $0x18] sm:$0xff]
        %v444 = vld [vmem:[%s439 + $0x20] sm:$0xff]
        %v445 = vld [vmem:[%s439 + $0x28] sm:$0xff]
        %v446 = vld [vmem:[%s439 + $0x30] sm:$0xff]
        %v447 = vld [vmem:[%s439 + $0x38] sm:$0xff]
        %v448 = vld [vmem:[%s439 + $0x40] sm:$0xff]
        %v449 = vld [vmem:[%s439 + $0x48] sm:$0xff]
        %v450 = vld [vmem:[%s439 + $0x50] sm:$0xff]
        %v451 = vld [vmem:[%s439 + $0x58] sm:$0xff]
        %v452 = vld [vmem:[%s439 + $0x60] sm:$0xff]
        %v453 = vld [vmem:[%s439 + $0x68] sm:$0xff]
        %v454 = vld [vmem:[%s439 + $0x70] sm:$0xff]
        %v455 = vld [vmem:[%s439 + $0x78] sm:$0xff]
        %456 = vmatpush.msra.mxu0 %v455
        %457 = vmatpush.msra.mxu0 %v454
        %458 = vmatpush.msra.mxu0 %v453
        %459 = vmatpush.msra.mxu0 %v452
        %460 = vmatpush.msra.mxu0 %v451
        %461 = vmatpush.msra.mxu0 %v450
        %462 = vmatpush.msra.mxu0 %v449
        %463 = vmatpush.msra.mxu0 %v448
        %464 = vmatpush.msra.mxu0 %v447
        %465 = vmatpush.msra.mxu0 %v446
        %466 = vmatpush.msra.mxu0 %v445
        %467 = vmatpush.msra.mxu0 %v444
        %468 = vmatpush.msra.mxu0 %v443
        %469 = vmatpush.msra.mxu0 %v442
        %470 = vmatpush.msra.mxu0 %v441
        %471 = vmatpush.msra.mxu0 %v440
        %472 = vmatmul.f32.gmra.mxu0 %v437
        %v473 = vpop.f32.mrf.mxu0
        %v474 = vadd.f32 0.0, %v473
        %475 = vmatmul.f32.gmra.mxu0 %v438
        %v476 = vpop.f32.mrf.mxu0
        %v477 = vadd.f32 0.0, %v476
        %478 = vdwg.mxu0
        %479 = vmatpush.msra.mxu0 %v436
        %480 = vmatpush.msra.mxu0 %v435
        %481 = vmatpush.msra.mxu0 %v434
        %482 = vmatpush.msra.mxu0 %v433
        %483 = vmatpush.msra.mxu0 %v432
        %484 = vmatpush.msra.mxu0 %v431
        %485 = vmatpush.msra.mxu0 %v430
        %486 = vmatpush.msra.mxu0 %v429
        %487 = vmatpush.msra.mxu0 %v428
        %488 = vmatpush.msra.mxu0 %v427
        %489 = vmatpush.msra.mxu0 %v426
        %490 = vmatpush.msra.mxu0 %v425
        %491 = vmatpush.msra.mxu0 %v424
        %492 = vmatpush.msra.mxu0 %v423
        %493 = vmatpush.msra.mxu0 %v422
        %494 = vmatpush.msra.mxu0 %v421
        %495 = vmatmul.f32.gmra.mxu0 %v419
        %v496 = vpop.f32.mrf.mxu0
        %v497 = vadd.f32 %v474, %v496
        %498 = vmatmul.f32.gmra.mxu0 %v420
        %v499 = vpop.f32.mrf.mxu0
        %v500 = vadd.f32 %v477, %v499
        %501 = vdwg.mxu0
        %v502 = vld [vmem:[#allocation3 + $0x2] sm:$0xff]
        %v503 = vld [vmem:[#allocation3 + $0xa] sm:$0xff]
        %s504 = scalar_lea.vmem [#allocation9], 256
        %v505 = vld [vmem:[%s504] sm:$0xff]
        %v506 = vld [vmem:[%s504 + $0x8] sm:$0xff]
        %v507 = vld [vmem:[%s504 + $0x10] sm:$0xff]
        %v508 = vld [vmem:[%s504 + $0x18] sm:$0xff]
        %v509 = vld [vmem:[%s504 + $0x20] sm:$0xff]
        %v510 = vld [vmem:[%s504 + $0x28] sm:$0xff]
        %v511 = vld [vmem:[%s504 + $0x30] sm:$0xff]
        %v512 = vld [vmem:[%s504 + $0x38] sm:$0xff]
        %v513 = vld [vmem:[%s504 + $0x40] sm:$0xff]
        %v514 = vld [vmem:[%s504 + $0x48] sm:$0xff]
        %v515 = vld [vmem:[%s504 + $0x50] sm:$0xff]
        %v516 = vld [vmem:[%s504 + $0x58] sm:$0xff]
        %v517 = vld [vmem:[%s504 + $0x60] sm:$0xff]
        %v518 = vld [vmem:[%s504 + $0x68] sm:$0xff]
        %v519 = vld [vmem:[%s504 + $0x70] sm:$0xff]
        %v520 = vld [vmem:[%s504 + $0x78] sm:$0xff]
        %521 = vmatpush.msra.mxu0 %v520
        %522 = vmatpush.msra.mxu0 %v519
        %523 = vmatpush.msra.mxu0 %v518
        %524 = vmatpush.msra.mxu0 %v517
        %525 = vmatpush.msra.mxu0 %v516
        %526 = vmatpush.msra.mxu0 %v515
        %527 = vmatpush.msra.mxu0 %v514
        %528 = vmatpush.msra.mxu0 %v513
        %529 = vmatpush.msra.mxu0 %v512
        %530 = vmatpush.msra.mxu0 %v511
        %531 = vmatpush.msra.mxu0 %v510
        %532 = vmatpush.msra.mxu0 %v509
        %533 = vmatpush.msra.mxu0 %v508
        %534 = vmatpush.msra.mxu0 %v507
        %535 = vmatpush.msra.mxu0 %v506
        %536 = vmatpush.msra.mxu0 %v505
        %537 = vmatmul.f32.gmra.mxu0 %v502
        %v538 = vpop.f32.mrf.mxu0
        %v539 = vadd.f32 0.0, %v538
        %540 = vmatmul.f32.gmra.mxu0 %v503
        %v541 = vpop.f32.mrf.mxu0
        %v542 = vadd.f32 0.0, %v541
        %543 = vdwg.mxu0
        %v544 = vadd.f32 %v497, %v539
        %v545 = vadd.f32 %v500, %v542
        %v546 = vld [vmem:[%s4] sm:$0x1]
        %v548 = vperm.slane %v546, 0
        %v550 = vadd.f32 %v544, %v548
        %v551 = vadd.f32 %v545, %v548
        %v552 = vmax.f32 %v550, 0.0
        %v553 = vmax.f32 %v551, 0.0
        %554 = vst [vmem:[%s277] sm:$0xff] %v552
        %555 = vst [vmem:[%s277 + $0x8] sm:$0xff] %v553
        %s556 = sand.u32 %s141, 1
        %s557 = scalar_lea.sflag [#allocation6], %s556
        %s558 = sand.u32 %s141, 1
        %s559 = smul.addr %s558, 16
        %s560 = scalar_lea.vmem [#allocation10], %s559
        // Predicated region
        $region53: #{tpu_custom_call.1} parent=39 // pred_check
          %p561 = pneg %p151
        $region54: #{tpu_custom_call.1} parent=39 // pred_check_branch
          %563 = sbr.rel (%p561) target = $region56
        $region55: #{tpu_custom_call.1} parent=39 // pred_region
          %565 = vsyncadd %s557, 0
          %s566 = smul.addr %s23, 2
          %s567 = smul.addr %s566, 8
          %s568 = scalar_lea.hbm %s5, %s567
          %s569 = sshll.u32 %s560, 4
          %s570 = int_to_ptr.vmem [resolvable:$true] %s569
          %s571 = sshll.u32 %s568, 4
          %s572 = int_to_ptr.hbm [resolvable:$true] %s571
          %577 = dma.vmem_to_hbm [thread:$0]  %s570, 256, %s572, %s557, 128, 128, 8
        $region56: #{tpu_custom_call.1} parent=39 // pred_fallthru
          _
      $region40: #{tpu_custom_call.1} parent=5 // pred_fallthru
        _
      %p578 = scmp.le.s32.totalorder 2, %s18
      // Predicated region
      $region57: #{tpu_custom_call.1} parent=5 // pred_check
        %p579 = pneg %p578
      $region58: #{tpu_custom_call.1} parent=5 // pred_check_branch
        %581 = sbr.rel (%p579) target = $region60
      $region59: #{tpu_custom_call.1} parent=5 // pred_region
        %s582 = ssub.s32 %s18, 2
        // Predicated region
        $region61: #{tpu_custom_call.1} parent=59 // pred_check
          %p583 = pneg %p157
        $region62: #{tpu_custom_call.1} parent=59 // pred_check_branch
          %585 = sbr.rel (%p583) target = $region64
        $region63: #{tpu_custom_call.1} parent=59 // pred_region
          %s586 = sand.u32 %s142, 1
          %s587 = scalar_lea.sflag [#allocation6], %s586
          %s588 = sand.u32 %s142, 1
          %s589 = smul.addr %s588, 16
          %s590 = scalar_lea.vmem [#allocation10], %s589
          %592 = dma.done %s587, 256
        $region64: #{tpu_custom_call.1} parent=59 // pred_fallthru
          _
      $region60: #{tpu_custom_call.1} parent=5 // pred_fallthru
        _
    $region6: #{tpu_custom_call.1} parent=1 // loop_footer
      %s22 = sadd.s32 1, %s18
    $region7: #{tpu_custom_call.1} parent=1 // loop_footer_branch
      %17 = sbr.rel target = $region3
    $region8: #{tpu_custom_call.1} parent=1 // loop_exit
      _
    %593 = vsyncpa [#allocation5], 1
    %s594 = scalar_lea.sflag [#allocation5], 1
    %595 = vsyncpa %s594, 1
    %596 = vsyncpa [#allocation8], 1
    %597 = vsyncpa [#allocation6], 1
    %s598 = scalar_lea.sflag [#allocation6], 1
    %599 = vsyncpa %s598, 1

</llo_original>
